<compile_context>
chip_gen: v6e
topology: v6e:2x2x1
jax: 0.10.0
libtpu: 0.0.40
codegen_flags: <defaults>
</compile_context>

<pallas_src>
import jax
import jax.numpy as jnp
from jax.experimental import pallas as pl
from jax.experimental.pallas import tpu as pltpu

LANE = 128  # TPU lane width: the output label axis is padded to this.


def _linear_kernel(x_ref, w_ref, b_ref, logits_ref):
    """logits[:, :L] = (bf16(x) @ W_bf16 + b) with f32 MXU accumulation.

    x_ref      : [Bt, H]  float32   (cast to bf16 in-kernel; VPU is idle here)
    w_ref      : [H,  L]  bfloat16  (un-padded label axis)
    b_ref      : [1,  L]  float32
    logits_ref : [Bt, LP] float32   (LP = L rounded up to 128; tail zeroed)
    """
    L = w_ref.shape[1]
    LP = logits_ref.shape[1]

    x_bf = x_ref[...].astype(jnp.bfloat16)
    acc = jnp.dot(x_bf, w_ref[...], preferred_element_type=jnp.float32)  # [Bt, L]
    res = acc + b_ref[...]

    if L == LP:
        logits_ref[...] = res
    else:
        # Zero the full lane-dense tile once, then masked-store the real
        # columns.  Both stores are VMEM-local; the HBM writeback DMA of the
        # [Bt, LP] tile stays unmasked / lane-dense.
        logits_ref[...] = jnp.zeros_like(logits_ref)
        logits_ref[:, :L] = res


def init_classifier_params(w, b):
    """One-time parameter preparation (call at init, NOT per forward).

    w: [768, num_labels] float32 (already transposed vs. nn.Linear's [L, H]).
    b: [num_labels] float32.
    Returns (w_bf16 [H, L], b_f32 [1, L]) to be cached and reused.
    """
    w_bf = jnp.asarray(w, dtype=jnp.bfloat16)                # [H, L] bf16
    b2d = jnp.asarray(b, dtype=jnp.float32).reshape(1, -1)   # [1, L] f32
    return w_bf, b2d


def base_classifier_forward(pooled_output, w_bf, b2d, *, block_b=256,
                            return_padded=False):
    """pooled_output: [B, 768] f32; w_bf: [768, L] bf16; b2d: [1, L] f32.

    Returns (logits, pooled_output).  logits is [B, L] by default, or the
    lane-dense padded [B, LP] tile if return_padded=True (pad columns are
    exactly zero), letting a downstream softmax skip the wrapper slice.
    """
    B, H = pooled_output.shape
    L = w_bf.shape[1]
    LP = pl.cdiv(L, LANE) * LANE

    cost = pl.CostEstimate(
        flops=2 * B * H * L,
        transcendentals=0,
        bytes_accessed=(B * H * 4          # x (f32)
                        + H * L * 2        # W (bf16, un-padded)
                        + L * 4            # b
                        + B * LP * 4),     # logits out
    )

    use_grid = (B % block_b == 0) and (B // block_b >= 2)

    if use_grid:
        # Large batch: tile over B ("parallel" -> shards across v7x's 2 TCs).
        # W / b index_maps are pinned to block (0, 0) so the weights stay
        # resident in VMEM across batch tiles (no re-DMA per step).
        logits_pad = pl.pallas_call(
            _linear_kernel,
            out_shape=jax.ShapeDtypeStruct((B, LP), jnp.float32),
            grid_spec=pltpu.PrefetchScalarGridSpec(
                num_scalar_prefetch=0,
                grid=(B // block_b,),
                in_specs=[
                    pl.BlockSpec((block_b, H), lambda i: (i, 0)),  # x tile
                    pl.BlockSpec((H, L), lambda i: (0, 0)),        # W resident
                    pl.BlockSpec((1, L), lambda i: (0, 0)),        # b resident
                ],
                out_specs=pl.BlockSpec((block_b, LP), lambda i: (i, 0)),
            ),
            compiler_params=pltpu.CompilerParams(
                dimension_semantics=("parallel",)),
            cost_estimate=cost,
        )(pooled_output, w_bf, b2d)
    else:
        # Small batch: single un-gridded invocation, everything VMEM-resident
        # (~0.3 MiB total, far under every generation's scoped VMEM limit).
        logits_pad = pl.pallas_call(
            _linear_kernel,
            out_shape=jax.ShapeDtypeStruct((B, LP), jnp.float32),
            in_specs=[
                pl.BlockSpec(memory_space=pltpu.MemorySpace.VMEM),  # x  [B, H]
                pl.BlockSpec(memory_space=pltpu.MemorySpace.VMEM),  # W  [H, L]
                pl.BlockSpec(memory_space=pltpu.MemorySpace.VMEM),  # b  [1, L]
            ],
            out_specs=pl.BlockSpec(memory_space=pltpu.MemorySpace.VMEM),
            cost_estimate=cost,
        )(pooled_output, w_bf, b2d)

    if return_padded:
        return logits_pad, pooled_output
    return logits_pad[:, :L], pooled_output


if __name__ == "__main__":
    H = 768          # encoder hidden size (fixed by nn.Linear(768, num_labels))
    NUM_LABELS = 20  # default num_labels

    key = jax.random.PRNGKey(0)
    k_x, k_w, k_b, k_x2 = jax.random.split(key, 4)

    # Classifier parameters, stored transposed as [H, L] for the kernel layout.
    bound = 1.0 / jnp.sqrt(jnp.float32(H))
    w = jax.random.uniform(k_w, (H, NUM_LABELS), dtype=jnp.float32,
                           minval=-bound, maxval=bound)
    b = jax.random.uniform(k_b, (NUM_LABELS,), dtype=jnp.float32,
                           minval=-bound, maxval=bound)

    # One-time parameter prep (cached; not repeated per forward).
    w_bf, b2d = init_classifier_params(w, b)

    # Reference with the same bf16 operand rounding (f32 accumulate).
    def ref_logits(x):
        return (x.astype(jnp.bfloat16).astype(jnp.float32)
                @ w.astype(jnp.bfloat16).astype(jnp.float32) + b)

    # --- Small batch: un-gridded, VMEM-resident path -------------------------
    B1 = 8
    pooled_output = jax.random.normal(k_x, (B1, H), dtype=jnp.float32)
    logits, pooled = base_classifier_forward(pooled_output, w_bf, b2d)
    jax.block_until_ready((logits, pooled))

    assert logits.shape == (B1, NUM_LABELS)
    assert pooled.shape == (B1, H)
    assert jnp.allclose(logits, ref_logits(pooled_output), atol=2e-3, rtol=2e-3)
    # Loose sanity check against the full-f32 reference as well.
    assert jnp.allclose(logits, pooled_output @ w + b, atol=5e-2, rtol=5e-2)
    assert jnp.allclose(pooled, pooled_output)

    # --- Larger batch: parallel batch grid, W/b resident across tiles --------
    B2, BLOCK_B = 512, 128
    pooled2 = jax.random.normal(k_x2, (B2, H), dtype=jnp.float32)
    logits2, _ = base_classifier_forward(pooled2, w_bf, b2d, block_b=BLOCK_B)
    jax.block_until_ready(logits2)

    assert logits2.shape == (B2, NUM_LABELS)
    assert jnp.allclose(logits2, ref_logits(pooled2), atol=2e-3, rtol=2e-3)

    print("KERNEL_OK")
</pallas_src>

<mosaic_0001>
module attributes {stable_mosaic.version = 11 : i64} {
  func.func @_linear_kernel(%arg0: memref<8x768xf32, #tpu.memory_space<vmem>>, %arg1: memref<768x20xbf16, #tpu.memory_space<vmem>>, %arg2: memref<1x20xf32, #tpu.memory_space<vmem>>, %arg3: memref<8x128xf32, #tpu.memory_space<vmem>>) attributes {dimension_semantics = [], scalar_prefetch = 0 : i64, scratch_operands = 0 : i64, tpu.core_type = #tpu.core_type<tc>} {
    %c0 = arith.constant 0 : index
    %c0_0 = arith.constant 0 : index
    %0 = vector.load %arg0[%c0, %c0_0] : memref<8x768xf32, #tpu.memory_space<vmem>>, vector<8x768xf32>
    %1 = arith.truncf %0 : vector<8x768xf32> to vector<8x768xbf16>
    %c0_1 = arith.constant 0 : index
    %c0_2 = arith.constant 0 : index
    %2 = vector.load %arg1[%c0_1, %c0_2] : memref<768x20xbf16, #tpu.memory_space<vmem>>, vector<768x20xbf16>
    %cst = arith.constant dense<0.000000e+00> : vector<8x20xf32>
    %3 = tpu.matmul %1, %2, %cst {dimension_numbers = #tpu.dot_dimension_numbers<[1], [0], [0], [1], [0, 0, 1, 1], [], []>} : vector<8x768xbf16>, vector<768x20xbf16>, vector<8x20xf32> -> vector<8x20xf32>
    %c0_3 = arith.constant 0 : index
    %c0_4 = arith.constant 0 : index
    %4 = vector.load %arg2[%c0_3, %c0_4] : memref<1x20xf32, #tpu.memory_space<vmem>>, vector<1x20xf32>
    %5 = vector.broadcast %4 : vector<1x20xf32> to vector<8x20xf32>
    %6 = arith.addf %3, %5 : vector<8x20xf32>
    %cst_5 = arith.constant 0.000000e+00 : f32
    %7 = vector.broadcast %cst_5 : f32 to vector<8x128xf32>
    %c0_6 = arith.constant 0 : index
    %c0_7 = arith.constant 0 : index
    %8 = vector.load %arg3[%c0_6, %c0_7] : memref<8x128xf32, #tpu.memory_space<vmem>>, vector<8x128xf32>
    tpu.vector_store %arg3[%c0_6, %c0_7], %7 {strides = array<i32>} : memref<8x128xf32, #tpu.memory_space<vmem>>, vector<8x128xf32>,
    %c0_8 = arith.constant 0 : index
    %c0_9 = arith.constant 0 : index
    %9 = vector.load %arg3[%c0_8, %c0_9] : memref<8x128xf32, #tpu.memory_space<vmem>>, vector<8x20xf32>
    tpu.vector_store %arg3[%c0_8, %c0_9], %6 {strides = array<i32>} : memref<8x128xf32, #tpu.memory_space<vmem>>, vector<8x20xf32>,
    return
  }
}

</mosaic_0001>

<llo_original>
// kernel: tpu_custom_call.1
$region0: #{tpu_custom_call.1}
  #allocation0 [shape = 'u32[]', space=smem, size = 0x4, offset = 0x4, fixed_abs, tag = 'smem constant byte address 0x4 - core index']
  #allocation1 [shape = 'u32[144,128]{1,0:T(1,128)}', space=vmem, size = 0x12000, scoped, tag = 'internal scratch']
  %s0 = inlined_call_operand.vmem [shape: f32[8,768], index: 0, kind: input, shape index: {}]
  %s1 = inlined_call_operand.vmem [shape: bf16[768,20], index: 1, kind: input, shape index: {}]
  %s2 = inlined_call_operand.vmem [shape: f32[1,20], index: 2, kind: input, shape index: {}]
  %s3 = inlined_call_operand.hbm [shape: f32[8,128], index: 3, kind: output, shape index: {}]
  %s4 = sld [smem:[#allocation0]]
  $region22: #{tpu_custom_call.1} parent=0
    _
  %s6 = ssub.s32 1, %s4
  %s7 = scalar_select 0, %s6, %s4
  $region1: #{tpu_custom_call.1} parent=0
    #allocation2 [shape = 'u8[4096]{0}', space=vmem, size = 0x1000, scoped, tag = 'output window, operand 0, single buffered']
    #allocation3 [shape = 's32[1]{0}', space=sflag, size = 0x4, scoped, tag = 'scoped memory for tpu_custom_call.1']
    %8 = vsyncpa [#allocation3], 0
    // Predicated region
    $region2: #{tpu_custom_call.1} parent=1 // pred_check
      _
    $region3: #{tpu_custom_call.1} parent=1 // pred_check_branch
      %10 = sbr.rel (0) target = $region5
    $region4: #{tpu_custom_call.1} parent=1 // pred_region
      _
    $region5: #{tpu_custom_call.1} parent=1 // pred_fallthru
      _
    // Predicated region
    $region6: #{tpu_custom_call.1} parent=1 // pred_check
      _
    $region7: #{tpu_custom_call.1} parent=1 // pred_check_branch
      %12 = sbr.rel (0) target = $region9
    $region8: #{tpu_custom_call.1} parent=1 // pred_region
      _
    $region9: #{tpu_custom_call.1} parent=1 // pred_fallthru
      _
    // Predicated region
    $region10: #{tpu_custom_call.1} parent=1 // pred_check
      _
    $region11: #{tpu_custom_call.1} parent=1 // pred_check_branch
      %14 = sbr.rel (0) target = $region13
    $region12: #{tpu_custom_call.1} parent=1 // pred_region
      _
    $region13: #{tpu_custom_call.1} parent=1 // pred_fallthru
      _
    %v16 = vld [vmem:[%s0] sm:$0xff]
    %v17 = vld [vmem:[%s0 + $0x8] sm:$0xff]
    %v18 = vld [vmem:[%s0 + $0x10] sm:$0xff]
    %v19 = vld [vmem:[%s0 + $0x18] sm:$0xff]
    %v20 = vld [vmem:[%s0 + $0x20] sm:$0xff]
    %v21 = vld [vmem:[%s0 + $0x28] sm:$0xff]
    %v22 = vpack.c.bf16 %v16, %v16
    %v23 = vpack.c.bf16 %v17, %v17
    %v24 = vpack.c.bf16 %v18, %v18
    %v25 = vpack.c.bf16 %v19, %v19
    %v26 = vpack.c.bf16 %v20, %v20
    %v27 = vpack.c.bf16 %v21, %v21
    %v28 = vld [vmem:[%s1] sm:$0xf]
    %v29 = vld [vmem:[%s1 + $0x4] sm:$0xf]
    %v30 = vld [vmem:[%s1 + $0x8] sm:$0xf]
    %v31 = vld [vmem:[%s1 + $0xc] sm:$0xf]
    %v32 = vld [vmem:[%s1 + $0x10] sm:$0xf]
    %v33 = vld [vmem:[%s1 + $0x14] sm:$0xf]
    %v34 = vld [vmem:[%s1 + $0x18] sm:$0xf]
    %v35 = vld [vmem:[%s1 + $0x1c] sm:$0xf]
    %v36 = vld [vmem:[%s1 + $0x20] sm:$0xf]
    %v37 = vld [vmem:[%s1 + $0x24] sm:$0xf]
    %v38 = vld [vmem:[%s1 + $0x28] sm:$0xf]
    %v39 = vld [vmem:[%s1 + $0x2c] sm:$0xf]
    %v40 = vld [vmem:[%s1 + $0x30] sm:$0xf]
    %v41 = vld [vmem:[%s1 + $0x34] sm:$0xf]
    %v42 = vld [vmem:[%s1 + $0x38] sm:$0xf]
    %v43 = vld [vmem:[%s1 + $0x3c] sm:$0xf]
    %v44 = vld [vmem:[%s1 + $0x40] sm:$0xf]
    %v45 = vld [vmem:[%s1 + $0x44] sm:$0xf]
    %v46 = vld [vmem:[%s1 + $0x48] sm:$0xf]
    %v47 = vld [vmem:[%s1 + $0x4c] sm:$0xf]
    %v48 = vld [vmem:[%s1 + $0x50] sm:$0xf]
    %v49 = vld [vmem:[%s1 + $0x54] sm:$0xf]
    %v50 = vld [vmem:[%s1 + $0x58] sm:$0xf]
    %v51 = vld [vmem:[%s1 + $0x5c] sm:$0xf]
    %v52 = vld [vmem:[%s1 + $0x60] sm:$0xf]
    %v53 = vld [vmem:[%s1 + $0x64] sm:$0xf]
    %v54 = vld [vmem:[%s1 + $0x68] sm:$0xf]
    %v55 = vld [vmem:[%s1 + $0x6c] sm:$0xf]
    %v56 = vld [vmem:[%s1 + $0x70] sm:$0xf]
    %v57 = vld [vmem:[%s1 + $0x74] sm:$0xf]
    %v58 = vld [vmem:[%s1 + $0x78] sm:$0xf]
    %v59 = vld [vmem:[%s1 + $0x7c] sm:$0xf]
    %v60 = vld [vmem:[%s1 + $0x80] sm:$0xf]
    %v61 = vld [vmem:[%s1 + $0x84] sm:$0xf]
    %v62 = vld [vmem:[%s1 + $0x88] sm:$0xf]
    %v63 = vld [vmem:[%s1 + $0x8c] sm:$0xf]
    %v64 = vld [vmem:[%s1 + $0x90] sm:$0xf]
    %v65 = vld [vmem:[%s1 + $0x94] sm:$0xf]
    %v66 = vld [vmem:[%s1 + $0x98] sm:$0xf]
    %v67 = vld [vmem:[%s1 + $0x9c] sm:$0xf]
    %v68 = vld [vmem:[%s1 + $0xa0] sm:$0xf]
    %v69 = vld [vmem:[%s1 + $0xa4] sm:$0xf]
    %v70 = vld [vmem:[%s1 + $0xa8] sm:$0xf]
    %v71 = vld [vmem:[%s1 + $0xac] sm:$0xf]
    %v72 = vld [vmem:[%s1 + $0xb0] sm:$0xf]
    %v73 = vld [vmem:[%s1 + $0xb4] sm:$0xf]
    %v74 = vld [vmem:[%s1 + $0xb8] sm:$0xf]
    %v75 = vld [vmem:[%s1 + $0xbc] sm:$0xf]
    %v76 = vld [vmem:[%s1 + $0xc0] sm:$0xf]
    %v77 = vld [vmem:[%s1 + $0xc4] sm:$0xf]
    %v78 = vld [vmem:[%s1 + $0xc8] sm:$0xf]
    %v79 = vld [vmem:[%s1 + $0xcc] sm:$0xf]
    %v80 = vld [vmem:[%s1 + $0xd0] sm:$0xf]
    %v81 = vld [vmem:[%s1 + $0xd4] sm:$0xf]
    %v82 = vld [vmem:[%s1 + $0xd8] sm:$0xf]
    %v83 = vld [vmem:[%s1 + $0xdc] sm:$0xf]
    %v84 = vld [vmem:[%s1 + $0xe0] sm:$0xf]
    %v85 = vld [vmem:[%s1 + $0xe4] sm:$0xf]
    %v86 = vld [vmem:[%s1 + $0xe8] sm:$0xf]
    %v87 = vld [vmem:[%s1 + $0xec] sm:$0xf]
    %v88 = vld [vmem:[%s1 + $0xf0] sm:$0xf]
    %v89 = vld [vmem:[%s1 + $0xf4] sm:$0xf]
    %v90 = vld [vmem:[%s1 + $0xf8] sm:$0xf]
    %v91 = vld [vmem:[%s1 + $0xfc] sm:$0xf]
    %v92 = vld [vmem:[%s1 + $0x100] sm:$0xf]
    %v93 = vld [vmem:[%s1 + $0x104] sm:$0xf]
    %v94 = vld [vmem:[%s1 + $0x108] sm:$0xf]
    %v95 = vld [vmem:[%s1 + $0x10c] sm:$0xf]
    %v96 = vld [vmem:[%s1 + $0x110] sm:$0xf]
    %v97 = vld [vmem:[%s1 + $0x114] sm:$0xf]
    %v98 = vld [vmem:[%s1 + $0x118] sm:$0xf]
    %v99 = vld [vmem:[%s1 + $0x11c] sm:$0xf]
    %v100 = vld [vmem:[%s1 + $0x120] sm:$0xf]
    %v101 = vld [vmem:[%s1 + $0x124] sm:$0xf]
    %v102 = vld [vmem:[%s1 + $0x128] sm:$0xf]
    %v103 = vld [vmem:[%s1 + $0x12c] sm:$0xf]
    %v104 = vld [vmem:[%s1 + $0x130] sm:$0xf]
    %v105 = vld [vmem:[%s1 + $0x134] sm:$0xf]
    %v106 = vld [vmem:[%s1 + $0x138] sm:$0xf]
    %v107 = vld [vmem:[%s1 + $0x13c] sm:$0xf]
    %v108 = vld [vmem:[%s1 + $0x140] sm:$0xf]
    %v109 = vld [vmem:[%s1 + $0x144] sm:$0xf]
    %v110 = vld [vmem:[%s1 + $0x148] sm:$0xf]
    %v111 = vld [vmem:[%s1 + $0x14c] sm:$0xf]
    %v112 = vld [vmem:[%s1 + $0x150] sm:$0xf]
    %v113 = vld [vmem:[%s1 + $0x154] sm:$0xf]
    %v114 = vld [vmem:[%s1 + $0x158] sm:$0xf]
    %v115 = vld [vmem:[%s1 + $0x15c] sm:$0xf]
    %v116 = vld [vmem:[%s1 + $0x160] sm:$0xf]
    %v117 = vld [vmem:[%s1 + $0x164] sm:$0xf]
    %v118 = vld [vmem:[%s1 + $0x168] sm:$0xf]
    %v119 = vld [vmem:[%s1 + $0x16c] sm:$0xf]
    %v120 = vld [vmem:[%s1 + $0x170] sm:$0xf]
    %v121 = vld [vmem:[%s1 + $0x174] sm:$0xf]
    %v122 = vld [vmem:[%s1 + $0x178] sm:$0xf]
    %v123 = vld [vmem:[%s1 + $0x17c] sm:$0xf]
    %v124 = vld [vmem:[%s2] sm:$0x1]
    %v126 = vlaneseq
    %v127 = vshrl.u32 %v126, 7
    %v128 = vsub.s32 0, %v127
    %v129 = vrot.slane %v124, %v128
    %v227 = vunpack.c.l.b16 %v28
    %v228 = vunpack.c.l.b16 %v29
    %v229 = vunpack.c.l.b16 %v30
    %v230 = vunpack.c.l.b16 %v31
    %v231 = vunpack.c.l.b16 %v32
    %v232 = vunpack.c.l.b16 %v33
    %v233 = vunpack.c.l.b16 %v34
    %v234 = vunpack.c.l.b16 %v35
    %v235 = vunpack.c.l.b16 %v36
    %v236 = vunpack.c.l.b16 %v37
    %v237 = vunpack.c.l.b16 %v38
    %v238 = vunpack.c.l.b16 %v39
    %v239 = vunpack.c.l.b16 %v40
    %v240 = vunpack.c.l.b16 %v41
    %v241 = vunpack.c.l.b16 %v42
    %v242 = vunpack.c.l.b16 %v43
    %v243 = vunpack.c.l.b16 %v44
    %v244 = vunpack.c.l.b16 %v45
    %v245 = vunpack.c.l.b16 %v46
    %v246 = vunpack.c.l.b16 %v47
    %v247 = vunpack.c.l.b16 %v48
    %v248 = vunpack.c.l.b16 %v49
    %v249 = vunpack.c.l.b16 %v50
    %v250 = vunpack.c.l.b16 %v51
    %v251 = vunpack.c.l.b16 %v52
    %v252 = vunpack.c.l.b16 %v53
    %v253 = vunpack.c.l.b16 %v54
    %v254 = vunpack.c.l.b16 %v55
    %v255 = vunpack.c.l.b16 %v56
    %v256 = vunpack.c.l.b16 %v57
    %v257 = vunpack.c.l.b16 %v58
    %v258 = vunpack.c.l.b16 %v59
    %v259 = vunpack.c.l.b16 %v60
    %v260 = vunpack.c.l.b16 %v61
    %v261 = vunpack.c.l.b16 %v62
    %v262 = vunpack.c.l.b16 %v63
    %v263 = vunpack.c.l.b16 %v64
    %v264 = vunpack.c.l.b16 %v65
    %v265 = vunpack.c.l.b16 %v66
    %v266 = vunpack.c.l.b16 %v67
    %v267 = vunpack.c.l.b16 %v68
    %v268 = vunpack.c.l.b16 %v69
    %v269 = vunpack.c.l.b16 %v70
    %v270 = vunpack.c.l.b16 %v71
    %v271 = vunpack.c.l.b16 %v72
    %v272 = vunpack.c.l.b16 %v73
    %v273 = vunpack.c.l.b16 %v74
    %v274 = vunpack.c.l.b16 %v75
    %v275 = vunpack.c.l.b16 %v76
    %v276 = vunpack.c.l.b16 %v77
    %v277 = vunpack.c.l.b16 %v78
    %v278 = vunpack.c.l.b16 %v79
    %v279 = vunpack.c.l.b16 %v80
    %v280 = vunpack.c.l.b16 %v81
    %v281 = vunpack.c.l.b16 %v82
    %v282 = vunpack.c.l.b16 %v83
    %v283 = vunpack.c.l.b16 %v84
    %v284 = vunpack.c.l.b16 %v85
    %v285 = vunpack.c.l.b16 %v86
    %v286 = vunpack.c.l.b16 %v87
    %v287 = vunpack.c.l.b16 %v88
    %v288 = vunpack.c.l.b16 %v89
    %v289 = vunpack.c.l.b16 %v90
    %v290 = vunpack.c.l.b16 %v91
    %v291 = vunpack.c.l.b16 %v92
    %v292 = vunpack.c.l.b16 %v93
    %v293 = vunpack.c.l.b16 %v94
    %v294 = vunpack.c.l.b16 %v95
    %v295 = vunpack.c.l.b16 %v96
    %v296 = vunpack.c.l.b16 %v97
    %v297 = vunpack.c.l.b16 %v98
    %v298 = vunpack.c.l.b16 %v99
    %v299 = vunpack.c.l.b16 %v100
    %v300 = vunpack.c.l.b16 %v101
    %v301 = vunpack.c.l.b16 %v102
    %v302 = vunpack.c.l.b16 %v103
    %v303 = vunpack.c.l.b16 %v104
    %v304 = vunpack.c.l.b16 %v105
    %v305 = vunpack.c.l.b16 %v106
    %v306 = vunpack.c.l.b16 %v107
    %v307 = vunpack.c.l.b16 %v108
    %v308 = vunpack.c.l.b16 %v109
    %v309 = vunpack.c.l.b16 %v110
    %v310 = vunpack.c.l.b16 %v111
    %v311 = vunpack.c.l.b16 %v112
    %v312 = vunpack.c.l.b16 %v113
    %v313 = vunpack.c.l.b16 %v114
    %v314 = vunpack.c.l.b16 %v115
    %v315 = vunpack.c.l.b16 %v116
    %v316 = vunpack.c.l.b16 %v117
    %v317 = vunpack.c.l.b16 %v118
    %v318 = vunpack.c.l.b16 %v119
    %v319 = vunpack.c.l.b16 %v120
    %v320 = vunpack.c.l.b16 %v121
    %v321 = vunpack.c.l.b16 %v122
    %v322 = vunpack.c.l.b16 %v123
    %v323 = vpack.c.b16 %v228, %v227
    %v324 = vpack.c.b16 %v230, %v229
    %v325 = vpack.c.b16 %v232, %v231
    %v326 = vpack.c.b16 %v234, %v233
    %v327 = vpack.c.b16 %v236, %v235
    %v328 = vpack.c.b16 %v238, %v237
    %v329 = vpack.c.b16 %v240, %v239
    %v330 = vpack.c.b16 %v242, %v241
    %v331 = vpack.c.b16 %v244, %v243
    %v332 = vpack.c.b16 %v246, %v245
    %v333 = vpack.c.b16 %v248, %v247
    %v334 = vpack.c.b16 %v250, %v249
    %v335 = vpack.c.b16 %v252, %v251
    %v336 = vpack.c.b16 %v254, %v253
    %v337 = vpack.c.b16 %v256, %v255
    %v338 = vpack.c.b16 %v258, %v257
    %v339 = vpack.c.b16 %v260, %v259
    %v340 = vpack.c.b16 %v262, %v261
    %v341 = vpack.c.b16 %v264, %v263
    %v342 = vpack.c.b16 %v266, %v265
    %v343 = vpack.c.b16 %v268, %v267
    %v344 = vpack.c.b16 %v270, %v269
    %v345 = vpack.c.b16 %v272, %v271
    %v346 = vpack.c.b16 %v274, %v273
    %v347 = vpack.c.b16 %v276, %v275
    %v348 = vpack.c.b16 %v278, %v277
    %v349 = vpack.c.b16 %v280, %v279
    %v350 = vpack.c.b16 %v282, %v281
    %v351 = vpack.c.b16 %v284, %v283
    %v352 = vpack.c.b16 %v286, %v285
    %v353 = vpack.c.b16 %v288, %v287
    %v354 = vpack.c.b16 %v290, %v289
    %v355 = vpack.c.b16 %v292, %v291
    %v356 = vpack.c.b16 %v294, %v293
    %v357 = vpack.c.b16 %v296, %v295
    %v358 = vpack.c.b16 %v298, %v297
    %v359 = vpack.c.b16 %v300, %v299
    %v360 = vpack.c.b16 %v302, %v301
    %v361 = vpack.c.b16 %v304, %v303
    %v362 = vpack.c.b16 %v306, %v305
    %v363 = vpack.c.b16 %v308, %v307
    %v364 = vpack.c.b16 %v310, %v309
    %v365 = vpack.c.b16 %v312, %v311
    %v366 = vpack.c.b16 %v314, %v313
    %v367 = vpack.c.b16 %v316, %v315
    %v368 = vpack.c.b16 %v318, %v317
    %v369 = vpack.c.b16 %v320, %v319
    %v370 = vpack.c.b16 %v322, %v321
    %419 = vmatprep.subr.bf16.mxu0 0
    %420 = vmatpush1.bf16.msra.mxu0 %v330
    %421 = vmatprep.subr.bf16.mxu0 0
    %422 = vmatpush1.bf16.msra.mxu0 %v329
    %423 = vmatprep.subr.bf16.mxu0 0
    %424 = vmatpush1.bf16.msra.mxu0 %v328
    %425 = vmatprep.subr.bf16.mxu0 0
    %426 = vmatpush1.bf16.msra.mxu0 %v327
    %427 = vmatprep.subr.bf16.mxu0 0
    %428 = vmatpush1.bf16.msra.mxu0 %v326
    %429 = vmatprep.subr.bf16.mxu0 0
    %430 = vmatpush1.bf16.msra.mxu0 %v325
    %431 = vmatprep.subr.bf16.mxu0 0
    %432 = vmatpush1.bf16.msra.mxu0 %v324
    %433 = vmatprep.subr.bf16.mxu0 0
    %434 = vmatpush1.bf16.msra.mxu0 %v323
    %435 = vmatprep.subr.bf16.mxu0 0
    %436 = vmatpush2.bf16.msra.mxu0 %v338
    %437 = vmatprep.subr.bf16.mxu0 0
    %438 = vmatpush2.bf16.msra.mxu0 %v337
    %439 = vmatprep.subr.bf16.mxu0 0
    %440 = vmatpush2.bf16.msra.mxu0 %v336
    %441 = vmatprep.subr.bf16.mxu0 0
    %442 = vmatpush2.bf16.msra.mxu0 %v335
    %443 = vmatprep.subr.bf16.mxu0 0
    %444 = vmatpush2.bf16.msra.mxu0 %v334
    %445 = vmatprep.subr.bf16.mxu0 0
    %446 = vmatpush2.bf16.msra.mxu0 %v333
    %447 = vmatprep.subr.bf16.mxu0 0
    %448 = vmatpush2.bf16.msra.mxu0 %v332
    %449 = vmatprep.subr.bf16.mxu0 0
    %450 = vmatpush2.bf16.msra.mxu0 %v331
    %451 = vmatprep.mubr.bf16.mxu0 %v23
    %452 = vmatmul.mubr.bf16.gmra.mxu0 %v22
    %v453 = vpop.f32.mrf.mxu0
    %v454 = vadd.f32 %v129, %v453
    %v455 = vpop.f32.mrf.mxu0
    %v456 = vpop.f32.mrf.mxu0
    %v457 = vpop.f32.mrf.mxu0
    %458 = vdwg.mxu0
    %459 = vmatprep.subr.bf16.mxu0 0
    %460 = vmatpush1.bf16.msra.mxu0 %v346
    %461 = vmatprep.subr.bf16.mxu0 0
    %462 = vmatpush1.bf16.msra.mxu0 %v345
    %463 = vmatprep.subr.bf16.mxu0 0
    %464 = vmatpush1.bf16.msra.mxu0 %v344
    %465 = vmatprep.subr.bf16.mxu0 0
    %466 = vmatpush1.bf16.msra.mxu0 %v343
    %467 = vmatprep.subr.bf16.mxu0 0
    %468 = vmatpush1.bf16.msra.mxu0 %v342
    %469 = vmatprep.subr.bf16.mxu0 0
    %470 = vmatpush1.bf16.msra.mxu0 %v341
    %471 = vmatprep.subr.bf16.mxu0 0
    %472 = vmatpush1.bf16.msra.mxu0 %v340
    %473 = vmatprep.subr.bf16.mxu0 0
    %474 = vmatpush1.bf16.msra.mxu0 %v339
    %475 = vmatprep.subr.bf16.mxu0 0
    %476 = vmatpush2.bf16.msra.mxu0 %v354
    %477 = vmatprep.subr.bf16.mxu0 0
    %478 = vmatpush2.bf16.msra.mxu0 %v353
    %479 = vmatprep.subr.bf16.mxu0 0
    %480 = vmatpush2.bf16.msra.mxu0 %v352
    %481 = vmatprep.subr.bf16.mxu0 0
    %482 = vmatpush2.bf16.msra.mxu0 %v351
    %483 = vmatprep.subr.bf16.mxu0 0
    %484 = vmatpush2.bf16.msra.mxu0 %v350
    %485 = vmatprep.subr.bf16.mxu0 0
    %486 = vmatpush2.bf16.msra.mxu0 %v349
    %487 = vmatprep.subr.bf16.mxu0 0
    %488 = vmatpush2.bf16.msra.mxu0 %v348
    %489 = vmatprep.subr.bf16.mxu0 0
    %490 = vmatpush2.bf16.msra.mxu0 %v347
    %491 = vmatprep.mubr.bf16.mxu0 %v25
    %492 = vmatmul.mubr.bf16.gmra.mxu0 %v24
    %v493 = vpop.f32.mrf.mxu0
    %v494 = vadd.f32 %v454, %v493
    %v495 = vpop.f32.mrf.mxu0
    %v496 = vpop.f32.mrf.mxu0
    %v497 = vpop.f32.mrf.mxu0
    %498 = vdwg.mxu0
    %499 = vmatprep.subr.bf16.mxu0 0
    %500 = vmatpush1.bf16.msra.mxu0 %v362
    %501 = vmatprep.subr.bf16.mxu0 0
    %502 = vmatpush1.bf16.msra.mxu0 %v361
    %503 = vmatprep.subr.bf16.mxu0 0
    %504 = vmatpush1.bf16.msra.mxu0 %v360
    %505 = vmatprep.subr.bf16.mxu0 0
    %506 = vmatpush1.bf16.msra.mxu0 %v359
    %507 = vmatprep.subr.bf16.mxu0 0
    %508 = vmatpush1.bf16.msra.mxu0 %v358
    %509 = vmatprep.subr.bf16.mxu0 0
    %510 = vmatpush1.bf16.msra.mxu0 %v357
    %511 = vmatprep.subr.bf16.mxu0 0
    %512 = vmatpush1.bf16.msra.mxu0 %v356
    %513 = vmatprep.subr.bf16.mxu0 0
    %514 = vmatpush1.bf16.msra.mxu0 %v355
    %515 = vmatprep.subr.bf16.mxu0 0
    %516 = vmatpush2.bf16.msra.mxu0 %v370
    %517 = vmatprep.subr.bf16.mxu0 0
    %518 = vmatpush2.bf16.msra.mxu0 %v369
    %519 = vmatprep.subr.bf16.mxu0 0
    %520 = vmatpush2.bf16.msra.mxu0 %v368
    %521 = vmatprep.subr.bf16.mxu0 0
    %522 = vmatpush2.bf16.msra.mxu0 %v367
    %523 = vmatprep.subr.bf16.mxu0 0
    %524 = vmatpush2.bf16.msra.mxu0 %v366
    %525 = vmatprep.subr.bf16.mxu0 0
    %526 = vmatpush2.bf16.msra.mxu0 %v365
    %527 = vmatprep.subr.bf16.mxu0 0
    %528 = vmatpush2.bf16.msra.mxu0 %v364
    %529 = vmatprep.subr.bf16.mxu0 0
    %530 = vmatpush2.bf16.msra.mxu0 %v363
    %531 = vmatprep.mubr.bf16.mxu0 %v27
    %532 = vmatmul.mubr.bf16.gmra.mxu0 %v26
    %v533 = vpop.f32.mrf.mxu0
    %v534 = vadd.f32 %v494, %v533
    %v535 = vpop.f32.mrf.mxu0
    %v536 = vpop.f32.mrf.mxu0
    %v537 = vpop.f32.mrf.mxu0
    %538 = vdwg.mxu0
    %539 = vst [vmem:[#allocation2] sm:$0xff] 0.0
    %vm540 = vcmask 162816
    %541 = vst.msk [vmem:[#allocation2] sm:$0xff] %vm540, %v534
    // Predicated region
    $region14: #{tpu_custom_call.1} parent=1 // pred_check
      _
    $region15: #{tpu_custom_call.1} parent=1 // pred_check_branch
      %543 = sbr.rel (0) target = $region17
    $region16: #{tpu_custom_call.1} parent=1 // pred_region
      %s545 = ssub.s32 128, 128
      %546 = vsyncadd [#allocation3], %s545
      %s548 = sshll.u32 [#allocation2], 4
      %s549 = int_to_ptr.vmem [resolvable:$true] %s548
      %551 = dma.vmem_to_hbm [thread:$0]  %s549, 128, %s3, [#allocation3]
    $region17: #{tpu_custom_call.1} parent=1 // pred_fallthru
      _
    // Predicated region
    $region18: #{tpu_custom_call.1} parent=1 // pred_check
      _
    $region19: #{tpu_custom_call.1} parent=1 // pred_check_branch
      %553 = sbr.rel (0) target = $region21
    $region20: #{tpu_custom_call.1} parent=1 // pred_region
      %554 = dma.done [#allocation3], 128
    $region21: #{tpu_custom_call.1} parent=1 // pred_fallthru
      _
    %555 = vsyncpa [#allocation3], 1

</llo_original>
